<compile_context>
chip_gen: v5e
topology: v5e:2x2
jax: 0.10.0
libtpu: 0.0.40
codegen_flags: <defaults>
</compile_context>

<pallas_src>
import functools
import math

import jax
import jax.numpy as jnp
from jax.experimental import pallas as pl
from jax.experimental.pallas import tpu as pltpu


def _dsconv_kernel(x_ref, wdw_ref, wpw_ref, b_ref, o_ref, *, use_bf16_mxu):
    # x_ref  : (TB, C_in, L_in)    zero-padded sequences (K//2 halo + lane alignment)
    # wdw_ref: (C_in, K)           depthwise filters (one 1-D filter per channel)
    # wpw_ref: (C_out, C_in)       pointwise (1x1 conv) weights
    # b_ref  : (C_out, 1)          pointwise bias
    # o_ref  : (TB, C_out, L_out)  output (position t == original input position t)
    TB, C_in, L_in = x_ref.shape
    L_out = o_ref.shape[2]
    K = wdw_ref.shape[1]

    in_is_bf16 = x_ref.dtype == jnp.bfloat16
    mxu_dtype = jnp.bfloat16 if (in_is_bf16 or use_bf16_mxu) else jnp.float32

    # Hoist weights / bias once per grid step (JAX does not CSE broadcast_in_dim).
    wdw = wdw_ref[...].astype(jnp.float32)                         # (C_in, K)
    w_taps = [jnp.broadcast_to(wdw[:, j:j + 1], (C_in, L_out))     # K x (C_in, L_out)
              for j in range(K)]
    wpw = wpw_ref[...].astype(mxu_dtype)                           # (C_out, C_in)
    bias = b_ref[...].astype(jnp.float32)                          # (C_out, 1)

    for b in range(TB):                        # TB is static -> unrolled
        xb = x_ref[b].astype(jnp.float32)      # (C_in, L_in); cast once, not per tap
        # Depthwise: out[c, t] = sum_j wdw[c, j] * x[c, t + j - pad]
        #          = sum_j wdw[c, j] * x_padded[c, t + j]   (halo supplies the zeros)
        acc = w_taps[0] * xb[:, 0:L_out]       # j = 0 window is lane-aligned
        for j in range(1, K):                  # K is small & static -> unrolled
            acc = acc + w_taps[j] * xb[:, j:j + L_out]
        # Pointwise 1x1 conv on the MXU with f32 accumulation.
        out = jnp.dot(wpw, acc.astype(mxu_dtype),
                      preferred_element_type=jnp.float32)
        o_ref[b] = (out + bias).astype(o_ref.dtype)


def _vmem_budget():
    """(tile-sizing budget, vmem_limit_bytes), derived per TPU generation."""
    try:
        cap = int(pltpu.get_tpu_info().vmem_capacity_bytes)
    except Exception:  # non-TPU / interpret environments: assume the smallest (v7x)
        cap = 64 << 20
    tile_budget = min(cap // 3, 40 << 20)      # double-buffered IO + f32 working set
    vmem_limit = min(3 * cap // 4, 96 << 20)   # leave headroom for Mosaic scratch
    return tile_budget, vmem_limit


def _pick_batch_tile(N, C_in, C_out, L_in, L_out, K, itemsize, budget_bytes):
    """Largest divisor TB of N that fits the budget and keeps >= 2 grid steps."""
    # Double-buffered input/output blocks scale with TB; the f32 working set of the
    # per-batch-element inner loop (x, acc + transients, K weight slabs, matmul out)
    # does not.
    io_per_b = 2 * (C_in * L_in + C_out * L_out) * itemsize
    work_f32 = (C_in * L_in + (3 + K) * C_in * L_out + C_out * L_out) * 4
    # >= 2 grid steps when possible: v7x has 2 TensorCores sharding the "parallel"
    # axis, and the pipeline needs >= 2 steps to overlap DMA with compute.
    max_tb = N // 2 if N >= 2 else 1
    tb = 1
    for d in range(1, N + 1):
        if N % d == 0 and d <= max_tb and d * io_per_b + work_f32 <= budget_bytes:
            tb = d
    # TODO(synk): if even TB=1 exceeds the budget (very large C*L), tile C_in /
    # C_out / L as well instead of relying on the raised vmem_limit_bytes.
    return tb


def depthwise_separable_conv(x, w_dw, w_pw, b_pw, *, kernel_size, use_bf16_mxu=False):
    """x: (N, C_in, L); w_dw: (C_in, K); w_pw: (C_out, C_in); b_pw: (C_out,)."""
    N, C_in, L = x.shape
    C_out = w_pw.shape[0]
    K = kernel_size
    # PyTorch padding=K//2 only preserves length for odd K (QANet uses odd K).
    assert K % 2 == 1, "only odd kernel sizes are supported"
    pad = K // 2

    # Lane-dense output length, and an input length with room for the K-1 halo so
    # every in-kernel window slice reads only real data or zeros from the padding.
    L_out = ((L + 127) // 128) * 128
    L_in = ((L_out + (K - 1) + 127) // 128) * 128
    assert L_in >= L_out + K - 1 and L_in - L - pad >= 0
    x_p = jnp.pad(x, ((0, 0), (0, 0), (pad, L_in - L - pad)))
    b2d = b_pw.reshape(C_out, 1)

    tile_budget, vmem_limit = _vmem_budget()
    TB = _pick_batch_tile(N, C_in, C_out, L_in, L_out, K, x.dtype.itemsize, tile_budget)
    grid = (N // TB,)

    kernel = functools.partial(_dsconv_kernel, use_bf16_mxu=use_bf16_mxu)

    out_p = pl.pallas_call(
        kernel,
        out_shape=jax.ShapeDtypeStruct((N, C_out, L_out), x.dtype),
        grid_spec=pltpu.PrefetchScalarGridSpec(
            num_scalar_prefetch=0,
            grid=grid,
            in_specs=[
                pl.BlockSpec((TB, C_in, L_in), lambda i: (i, 0, 0)),   # padded input
                pl.BlockSpec((C_in, K), lambda i: (0, 0)),             # depthwise weights
                pl.BlockSpec((C_out, C_in), lambda i: (0, 0)),         # pointwise weights
                pl.BlockSpec((C_out, 1), lambda i: (0, 0)),            # pointwise bias
            ],
            out_specs=pl.BlockSpec((TB, C_out, L_out), lambda i: (i, 0, 0)),
        ),
        compiler_params=pltpu.CompilerParams(
            dimension_semantics=("parallel",),
            vmem_limit_bytes=vmem_limit,
        ),
    )(x_p, w_dw, w_pw, b2d)

    # Drop the lane-alignment tail (no-op copy cost when L is a multiple of 128).
    return out_p[:, :, :L]


def _reference(x, w_dw, w_pw, b_pw, *, kernel_size):
    """Pure-JAX reference matching PyTorch Conv1d semantics (cross-correlation)."""
    K = kernel_size
    pad = K // 2
    L = x.shape[-1]
    x_pad = jnp.pad(x, ((0, 0), (0, 0), (pad, pad)))
    dw = jnp.zeros(x.shape, x.dtype)
    for j in range(K):
        dw = dw + w_dw[None, :, j:j + 1] * x_pad[:, :, j:j + L]
    return jnp.einsum("oc,ncl->nol", w_pw, dw) + b_pw[None, :, None]


if __name__ == "__main__":
    # Small shapes consistent with the module (Conv1d => input is (N, C, L)).
    N, C_in, C_out, L, K = 2, 8, 16, 128, 5

    key = jax.random.PRNGKey(0)
    kx, kdw, kpw, kb = jax.random.split(key, 4)

    x = jax.random.normal(kx, (N, C_in, L), dtype=jnp.float32)

    # Deterministic init mimicking PyTorch Conv1d defaults (kaiming-uniform bounds).
    bound_dw = 1.0 / math.sqrt(1 * K)        # depthwise: fan_in = (C_in/groups)*K = K
    w_dw = jax.random.uniform(kdw, (C_in, K), jnp.float32, -bound_dw, bound_dw)
    bound_pw = 1.0 / math.sqrt(C_in * 1)     # pointwise: fan_in = C_in
    w_pw = jax.random.uniform(kpw, (C_out, C_in), jnp.float32, -bound_pw, bound_pw)
    b_pw = jax.random.uniform(kb, (C_out,), jnp.float32, -bound_pw, bound_pw)

    out = depthwise_separable_conv(x, w_dw, w_pw, b_pw, kernel_size=K)
    out = jax.block_until_ready(out)

    ref = _reference(x, w_dw, w_pw, b_pw, kernel_size=K)
    assert out.shape == (N, C_out, L), out.shape
    assert jnp.allclose(out, ref, atol=1e-4, rtol=1e-4), \
        float(jnp.max(jnp.abs(out - ref)))

    print("KERNEL_OK")
</pallas_src>

<mosaic_0001>
module attributes {stable_mosaic.version = 11 : i64} {
  func.func @_dsconv_kernel(%arg0: i32, %arg1: memref<1x8x256xf32, #tpu.memory_space<vmem>>, %arg2: memref<8x5xf32, #tpu.memory_space<vmem>>, %arg3: memref<16x8xf32, #tpu.memory_space<vmem>>, %arg4: memref<16x1xf32, #tpu.memory_space<vmem>>, %arg5: memref<1x16x128xf32, #tpu.memory_space<vmem>>) attributes {dimension_semantics = [#tpu.dimension_semantics<parallel>], iteration_bounds = array<i64: 2>, scalar_prefetch = 0 : i64, scratch_operands = 0 : i64, tpu.core_type = #tpu.core_type<tc>, window_params = [{transform_indices = @transform_0, window_bounds = array<i64: 1, 8, 256>}, {pipeline_mode = #tpu.pipeline_mode<synchronous>, transform_indices = @transform_1, window_bounds = array<i64: 8, 5>}, {pipeline_mode = #tpu.pipeline_mode<synchronous>, transform_indices = @transform_2, window_bounds = array<i64: 16, 8>}, {pipeline_mode = #tpu.pipeline_mode<synchronous>, transform_indices = @transform_3, window_bounds = array<i64: 16, 1>}, {transform_indices = @transform_4, window_bounds = array<i64: 1, 16, 128>}]} {
    %c0 = arith.constant 0 : index
    %c0_0 = arith.constant 0 : index
    %0 = vector.load %arg2[%c0, %c0_0] : memref<8x5xf32, #tpu.memory_space<vmem>>, vector<8x5xf32>
    %1 = vector.extract_strided_slice %0 {offsets = [0, 0], sizes = [8, 1], strides = [1, 1]} : vector<8x5xf32> to vector<8x1xf32>
    %2 = vector.shape_cast %1 : vector<8x1xf32> to vector<8x1xf32>
    %3 = vector.broadcast %2 : vector<8x1xf32> to vector<8x128xf32>
    %4 = vector.extract_strided_slice %0 {offsets = [0, 1], sizes = [8, 1], strides = [1, 1]} : vector<8x5xf32> to vector<8x1xf32>
    %5 = vector.shape_cast %4 : vector<8x1xf32> to vector<8x1xf32>
    %6 = vector.broadcast %5 : vector<8x1xf32> to vector<8x128xf32>
    %7 = vector.extract_strided_slice %0 {offsets = [0, 2], sizes = [8, 1], strides = [1, 1]} : vector<8x5xf32> to vector<8x1xf32>
    %8 = vector.shape_cast %7 : vector<8x1xf32> to vector<8x1xf32>
    %9 = vector.broadcast %8 : vector<8x1xf32> to vector<8x128xf32>
    %10 = vector.extract_strided_slice %0 {offsets = [0, 3], sizes = [8, 1], strides = [1, 1]} : vector<8x5xf32> to vector<8x1xf32>
    %11 = vector.shape_cast %10 : vector<8x1xf32> to vector<8x1xf32>
    %12 = vector.broadcast %11 : vector<8x1xf32> to vector<8x128xf32>
    %13 = vector.extract_strided_slice %0 {offsets = [0, 4], sizes = [8, 1], strides = [1, 1]} : vector<8x5xf32> to vector<8x1xf32>
    %14 = vector.shape_cast %13 : vector<8x1xf32> to vector<8x1xf32>
    %15 = vector.broadcast %14 : vector<8x1xf32> to vector<8x128xf32>
    %c0_1 = arith.constant 0 : index
    %c0_2 = arith.constant 0 : index
    %16 = vector.load %arg3[%c0_1, %c0_2] : memref<16x8xf32, #tpu.memory_space<vmem>>, vector<16x8xf32>
    %c0_3 = arith.constant 0 : index
    %c0_4 = arith.constant 0 : index
    %17 = vector.load %arg4[%c0_3, %c0_4] : memref<16x1xf32, #tpu.memory_space<vmem>>, vector<16x1xf32>
    %c0_5 = arith.constant 0 : index
    %c0_6 = arith.constant 0 : index
    %c0_7 = arith.constant 0 : index
    %18 = vector.load %arg1[%c0_5, %c0_6, %c0_7] : memref<1x8x256xf32, #tpu.memory_space<vmem>>, vector<1x8x256xf32>
    %19 = vector.shape_cast %18 : vector<1x8x256xf32> to vector<8x256xf32>
    %20 = vector.extract_strided_slice %19 {offsets = [0, 0], sizes = [8, 128], strides = [1, 1]} : vector<8x256xf32> to vector<8x128xf32>
    %21 = arith.mulf %3, %20 : vector<8x128xf32>
    %22 = vector.extract_strided_slice %19 {offsets = [0, 1], sizes = [8, 128], strides = [1, 1]} : vector<8x256xf32> to vector<8x128xf32>
    %23 = arith.mulf %6, %22 : vector<8x128xf32>
    %24 = arith.addf %21, %23 : vector<8x128xf32>
    %25 = vector.extract_strided_slice %19 {offsets = [0, 2], sizes = [8, 128], strides = [1, 1]} : vector<8x256xf32> to vector<8x128xf32>
    %26 = arith.mulf %9, %25 : vector<8x128xf32>
    %27 = arith.addf %24, %26 : vector<8x128xf32>
    %28 = vector.extract_strided_slice %19 {offsets = [0, 3], sizes = [8, 128], strides = [1, 1]} : vector<8x256xf32> to vector<8x128xf32>
    %29 = arith.mulf %12, %28 : vector<8x128xf32>
    %30 = arith.addf %27, %29 : vector<8x128xf32>
    %31 = vector.extract_strided_slice %19 {offsets = [0, 4], sizes = [8, 128], strides = [1, 1]} : vector<8x256xf32> to vector<8x128xf32>
    %32 = arith.mulf %15, %31 : vector<8x128xf32>
    %33 = arith.addf %30, %32 : vector<8x128xf32>
    %cst = arith.constant dense<0.000000e+00> : vector<16x128xf32>
    %34 = tpu.matmul %16, %33, %cst {dimension_numbers = #tpu.dot_dimension_numbers<[1], [0], [0], [1], [0, 0, 1, 1], [], []>} : vector<16x8xf32>, vector<8x128xf32>, vector<16x128xf32> -> vector<16x128xf32>
    %35 = vector.broadcast %17 : vector<16x1xf32> to vector<16x128xf32>
    %36 = arith.addf %34, %35 : vector<16x128xf32>
    %c0_8 = arith.constant 0 : index
    %c0_9 = arith.constant 0 : index
    %c0_10 = arith.constant 0 : index
    %37 = vector.load %arg5[%c0_8, %c0_9, %c0_10] : memref<1x16x128xf32, #tpu.memory_space<vmem>>, vector<1x16x128xf32>
    %38 = vector.shape_cast %37 : vector<1x16x128xf32> to vector<16x128xf32>
    %39 = vector.shape_cast %36 : vector<16x128xf32> to vector<1x16x128xf32>
    tpu.vector_store %arg5[%c0_8, %c0_9, %c0_10], %39 {strides = array<i32>} : memref<1x16x128xf32, #tpu.memory_space<vmem>>, vector<1x16x128xf32>,
    return
  }
  func.func @transform_0(%arg0: i32) -> (i32, i32, i32) {
    %c0_i32 = arith.constant 0 : i32
    %c0_i32_0 = arith.constant 0 : i32
    %c0_i32_1 = arith.constant 0 : i32
    return %arg0, %c0_i32, %c0_i32_0 : i32, i32, i32
  }
  func.func @transform_1(%arg0: i32) -> (i32, i32) {
    %c0_i32 = arith.constant 0 : i32
    %c0_i32_0 = arith.constant 0 : i32
    %c0_i32_1 = arith.constant 0 : i32
    return %c0_i32, %c0_i32_0 : i32, i32
  }
  func.func @transform_2(%arg0: i32) -> (i32, i32) {
    %c0_i32 = arith.constant 0 : i32
    %c0_i32_0 = arith.constant 0 : i32
    %c0_i32_1 = arith.constant 0 : i32
    return %c0_i32, %c0_i32_0 : i32, i32
  }
  func.func @transform_3(%arg0: i32) -> (i32, i32) {
    %c0_i32 = arith.constant 0 : i32
    %c0_i32_0 = arith.constant 0 : i32
    %c0_i32_1 = arith.constant 0 : i32
    return %c0_i32, %c0_i32_0 : i32, i32
  }
  func.func @transform_4(%arg0: i32) -> (i32, i32, i32) {
    %c0_i32 = arith.constant 0 : i32
    %c0_i32_0 = arith.constant 0 : i32
    %c0_i32_1 = arith.constant 0 : i32
    return %arg0, %c0_i32, %c0_i32_0 : i32, i32, i32
  }
}

</mosaic_0001>

<llo_original>
// kernel: tpu_custom_call.1
$region0: #{tpu_custom_call.1}
  #allocation0 [shape = 'u32[]', space=smem, size = 0x4, offset = 0x4, fixed_abs, tag = 'smem constant byte address 0x4 - core index']
  #allocation1 [shape = 'u32[72,128]{1,0:T(1,128)}', space=vmem, size = 0x9000, scoped, tag = 'internal scratch']
  %s0 = inlined_call_operand.vmem [shape: f32[2,8,256], index: 0, kind: input, shape index: {}]
  %s1 = inlined_call_operand.vmem [shape: f32[8,5], index: 1, kind: input, shape index: {}]
  %s2 = inlined_call_operand.vmem [shape: f32[16,8], index: 2, kind: input, shape index: {}]
  %s3 = inlined_call_operand.vmem [shape: f32[16,1], index: 3, kind: input, shape index: {}]
  %s4 = inlined_call_operand.hbm [shape: f32[2,16,128], index: 4, kind: output, shape index: {}]
  %s5 = sld [smem:[#allocation0]]
  $region49: #{tpu_custom_call.1} parent=0
    _
  %s7 = ssub.s32 1, %s5
  %s8 = scalar_select 0, %s7, %s5
  $region1: #{tpu_custom_call.1} parent=0
    #allocation2 [shape = 'u8[16384]{0}', space=vmem, size = 0x4000, scoped, tag = 'output window, operand 0']
    #allocation3 [shape = 's32[2]{0}', space=sflag, size = 0x8, scoped, tag = 'scoped memory for tpu_custom_call.1']
    %9 = vsyncpa [#allocation3], 0
    %s10 = scalar_lea.sflag [#allocation3], 1
    %11 = vsyncpa %s10, 0
    loop: start=0, step=1, limit=4
    $region2: #{tpu_custom_call.1} parent=1 // loop_pre_header
      _
    $region3: #{tpu_custom_call.1} parent=1 // loop_header
      %s13 = sphi 0, %s17
      %p14 = scmp.ge.s32.totalorder %s13, 4
      %s23 = sphi 0, %s25
      %s26 = sphi 0, %s23
      %s27 = sphi 0, %s26
      %s43 = sphi 0, %s27
      %s47 = sphi 0, %s47
      %s49 = sphi 0, %s47
      %s50 = sphi 0, %s49
      %s64 = sphi 0, %s50
      %s68 = sphi 0, %s68
      %s70 = sphi 0, %s68
      %s71 = sphi 0, %s70
      %s85 = sphi 0, %s71
      %s89 = sphi 0, %s89
      %s91 = sphi 0, %s89
      %s92 = sphi 0, %s91
      %s106 = sphi 0, %s92
      %s112 = sphi 0, %s114
      %s115 = sphi 0, %s112
      %s116 = sphi 0, %s115
      %s132 = sphi 0, %s116
    $region4: #{tpu_custom_call.1} parent=1 // loop_header_branch
      %16 = sbr.rel (%p14) target = $region8
    $region5: #{tpu_custom_call.1} parent=1 // loop_body
      %s18 = ssub.s32 %s13, 1
      %s19 = ssub.s32 %s13, 2
      %s20 = sadd.s32 %s13, 1
      %s21 = ssub.s32 %s13, %s20
      %p22 = scmp.eq.s32.totalorder %s21, 0
      %s24 = sadd.s32 %s23, 1
      %s25 = scalar_select %p22, %s23, %s24
      %p28 = pneg %p22
      %p29 = scmp.eq.s32.totalorder %s13, 1
      %p30 = por %p28, %p29
      %p31 = scmp.ne.s32.totalorder %s23, %s26
      %p32 = scmp.eq.s32.totalorder %s13, 0
      %p33 = por %p31, %p32
      %p34 = scmp.ne.s32.totalorder %s23, %s26
      %p35 = scmp.eq.s32.totalorder %s18, 1
      %p36 = por %p34, %p35
      %p37 = scmp.ne.s32.totalorder %s26, %s27
      %p38 = scmp.eq.s32.totalorder %s18, 0
      %p39 = por %p37, %p38
      %p40 = scmp.ne.s32.totalorder %s26, %s27
      %p41 = scmp.eq.s32.totalorder %s19, 1
      %p42 = por %p40, %p41
      %p44 = scmp.ne.s32.totalorder %s27, %s43
      %p45 = scmp.eq.s32.totalorder %s19, 0
      %p46 = por %p44, %p45
      %s48 = sadd.s32 %s47, 1
      %p51 = scmp.eq.s32.totalorder %s13, 1
      %p52 = scmp.ne.s32.totalorder %s47, %s49
      %p53 = scmp.eq.s32.totalorder %s13, 0
      %p54 = por %p52, %p53
      %p55 = scmp.ne.s32.totalorder %s47, %s49
      %p56 = scmp.eq.s32.totalorder %s18, 1
      %p57 = por %p55, %p56
      %p58 = scmp.ne.s32.totalorder %s49, %s50
      %p59 = scmp.eq.s32.totalorder %s18, 0
      %p60 = por %p58, %p59
      %p61 = scmp.ne.s32.totalorder %s49, %s50
      %p62 = scmp.eq.s32.totalorder %s19, 1
      %p63 = por %p61, %p62
      %p65 = scmp.ne.s32.totalorder %s50, %s64
      %p66 = scmp.eq.s32.totalorder %s19, 0
      %p67 = por %p65, %p66
      %s69 = sadd.s32 %s68, 1
      %p72 = scmp.eq.s32.totalorder %s13, 1
      %p73 = scmp.ne.s32.totalorder %s68, %s70
      %p74 = scmp.eq.s32.totalorder %s13, 0
      %p75 = por %p73, %p74
      %p76 = scmp.ne.s32.totalorder %s68, %s70
      %p77 = scmp.eq.s32.totalorder %s18, 1
      %p78 = por %p76, %p77
      %p79 = scmp.ne.s32.totalorder %s70, %s71
      %p80 = scmp.eq.s32.totalorder %s18, 0
      %p81 = por %p79, %p80
      %p82 = scmp.ne.s32.totalorder %s70, %s71
      %p83 = scmp.eq.s32.totalorder %s19, 1
      %p84 = por %p82, %p83
      %p86 = scmp.ne.s32.totalorder %s71, %s85
      %p87 = scmp.eq.s32.totalorder %s19, 0
      %p88 = por %p86, %p87
      %s90 = sadd.s32 %s89, 1
      %p93 = scmp.eq.s32.totalorder %s13, 1
      %p94 = scmp.ne.s32.totalorder %s89, %s91
      %p95 = scmp.eq.s32.totalorder %s13, 0
      %p96 = por %p94, %p95
      %p97 = scmp.ne.s32.totalorder %s89, %s91
      %p98 = scmp.eq.s32.totalorder %s18, 1
      %p99 = por %p97, %p98
      %p100 = scmp.ne.s32.totalorder %s91, %s92
      %p101 = scmp.eq.s32.totalorder %s18, 0
      %p102 = por %p100, %p101
      %p103 = scmp.ne.s32.totalorder %s91, %s92
      %p104 = scmp.eq.s32.totalorder %s19, 1
      %p105 = por %p103, %p104
      %p107 = scmp.ne.s32.totalorder %s92, %s106
      %p108 = scmp.eq.s32.totalorder %s19, 0
      %p109 = por %p107, %p108
      %s110 = ssub.s32 %s13, %s20
      %p111 = scmp.eq.s32.totalorder %s110, 0
      %s113 = sadd.s32 %s112, 1
      %s114 = scalar_select %p111, %s112, %s113
      %p117 = pneg %p111
      %p118 = scmp.eq.s32.totalorder %s13, 1
      %p119 = por %p117, %p118
      %p120 = scmp.ne.s32.totalorder %s112, %s115
      %p121 = scmp.eq.s32.totalorder %s13, 0
      %p122 = por %p120, %p121
      %p123 = scmp.ne.s32.totalorder %s112, %s115
      %p124 = scmp.eq.s32.totalorder %s18, 1
      %p125 = por %p123, %p124
      %p126 = scmp.ne.s32.totalorder %s115, %s116
      %p127 = scmp.eq.s32.totalorder %s18, 0
      %p128 = por %p126, %p127
      %p129 = scmp.ne.s32.totalorder %s115, %s116
      %p130 = scmp.eq.s32.totalorder %s19, 1
      %p131 = por %p129, %p130
      %p133 = scmp.ne.s32.totalorder %s116, %s132
      %p134 = scmp.eq.s32.totalorder %s19, 0
      %p135 = por %p133, %p134
      %p136 = scmp.le.s32.totalorder 1, %s13
      %p137 = scmp.lt.s32.totalorder %s13, 3
      %p138 = pnand %p136, %p137
      %p139 = pneg %p138
      // Predicated region
      $region9: #{tpu_custom_call.1} parent=5 // pred_check
        _
      $region10: #{tpu_custom_call.1} parent=5 // pred_check_branch
        %141 = sbr.rel (%p138) target = $region12
      $region11: #{tpu_custom_call.1} parent=5 // pred_region
        %s142 = ssub.s32 %s13, 1
        // Predicated region
        $region13: #{tpu_custom_call.1} parent=11 // pred_check
          %p143 = pneg %p60
        $region14: #{tpu_custom_call.1} parent=11 // pred_check_branch
          %145 = sbr.rel (%p143) target = $region16
        $region15: #{tpu_custom_call.1} parent=11 // pred_region
          _
        $region16: #{tpu_custom_call.1} parent=11 // pred_fallthru
          _
        // Predicated region
        $region17: #{tpu_custom_call.1} parent=11 // pred_check
          %p146 = pneg %p81
        $region18: #{tpu_custom_call.1} parent=11 // pred_check_branch
          %148 = sbr.rel (%p146) target = $region20
        $region19: #{tpu_custom_call.1} parent=11 // pred_region
          _
        $region20: #{tpu_custom_call.1} parent=11 // pred_fallthru
          _
        // Predicated region
        $region21: #{tpu_custom_call.1} parent=11 // pred_check
          %p149 = pneg %p102
        $region22: #{tpu_custom_call.1} parent=11 // pred_check_branch
          %151 = sbr.rel (%p149) target = $region24
        $region23: #{tpu_custom_call.1} parent=11 // pred_region
          _
        $region24: #{tpu_custom_call.1} parent=11 // pred_fallthru
          _
      $region12: #{tpu_custom_call.1} parent=5 // pred_fallthru
        _
      %p152 = scmp.lt.s32.totalorder %s13, 2
      // Predicated region
      $region25: #{tpu_custom_call.1} parent=5 // pred_check
        %p153 = pneg %p152
      $region26: #{tpu_custom_call.1} parent=5 // pred_check_branch
        %155 = sbr.rel (%p153) target = $region28
      $region27: #{tpu_custom_call.1} parent=5 // pred_region
        // Predicated region
        $region29: #{tpu_custom_call.1} parent=27 // pred_check
          %p156 = pneg %p33
        $region30: #{tpu_custom_call.1} parent=27 // pred_check_branch
          %158 = sbr.rel (%p156) target = $region32
        $region31: #{tpu_custom_call.1} parent=27 // pred_region
          %p159 = scmp.lt.s32.totalorder %s13, 1
          %s160 = scalar_select %p159, %s13, 1
          %s161 = smul.addr %s160, 2
          %s162 = smul.addr %s161, 8
          %s163 = scalar_lea.vmem %s0, %s162
        $region32: #{tpu_custom_call.1} parent=27 // pred_fallthru
          _
      $region28: #{tpu_custom_call.1} parent=5 // pred_fallthru
        _
      %p164 = scmp.le.s32.totalorder 1, %s13
      %p165 = scmp.lt.s32.totalorder %s13, 3
      %p166 = pnand %p164, %p165
      %p167 = pneg %p166
      // Predicated region
      $region33: #{tpu_custom_call.1} parent=5 // pred_check
        _
      $region34: #{tpu_custom_call.1} parent=5 // pred_check_branch
        %169 = sbr.rel (%p166) target = $region36
      $region35: #{tpu_custom_call.1} parent=5 // pred_region
        %s170 = ssub.s32 %s13, 1
        %p171 = scmp.lt.s32.totalorder %s18, 1
        %s172 = scalar_select %p171, %s18, 1
        %s173 = smul.addr %s172, 2
        %s174 = smul.addr %s173, 8
        %s175 = scalar_lea.vmem %s0, %s174
        %p176 = pneg %p39
        %p177 = pneg %p36
        %p178 = pneg %p60
        %p179 = pneg %p57
        %p180 = pneg %p81
        %p181 = pneg %p78
        %p182 = pneg %p102
        %p183 = pneg %p99
        %p184 = pneg %p128
        %p185 = pneg %p125
        %s186 = sand.u32 %s115, 1
        %s187 = scalar_lea.sflag [#allocation3], %s186
        %s188 = sand.u32 %s115, 1
        %s189 = smul.addr %s188, 16
        %s190 = scalar_lea.vmem [#allocation2], %s189
        %p191 = scmp.lt.s32.totalorder %s18, 1
        %s192 = scalar_select %p191, %s18, 1
        %s193 = smul.addr %s192, 2
        %s194 = smul.addr %s193, 8
        %s195 = scalar_lea.vmem %s0, %s194
        %v196 = vld [vmem:[%s1] sm:$0xff]
        %198 = vset.pattern.permute.xlu0 0
        %199 = vperm.xlu0 %198, %v196
        %v200 = vpop.permute.xlu0 %199
        %202 = vset.pattern.permute.xlu0 1
        %203 = vperm.xlu0 %202, %v196
        %v204 = vpop.permute.xlu0 %203
        %206 = vset.pattern.permute.xlu0 2
        %207 = vperm.xlu0 %206, %v196
        %v208 = vpop.permute.xlu0 %207
        %210 = vset.pattern.permute.xlu0 3
        %211 = vperm.xlu0 %210, %v196
        %v212 = vpop.permute.xlu0 %211
        %214 = vset.pattern.permute.xlu0 4
        %215 = vperm.xlu0 %214, %v196
        %v216 = vpop.permute.xlu0 %215
        %v218 = vld [vmem:[%s2] sm:$0xff]
        %v219 = vld [vmem:[%s2 + $0x8] sm:$0xff]
        %v220 = vld [vmem:[%s3] sm:$0xff]
        %v221 = vld [vmem:[%s3 + $0x8] sm:$0xff]
        %v222 = vld [vmem:[%s195] sm:$0xff]
        %v223 = vld [vmem:[%s195 + $0x8] sm:$0xff]
        %v224 = vmul.f32 %v200, %v222
        %v225 = vmul.f32 %v204, %v222
        %v226 = vmul.f32 %v204, %v223
        %229 = vrot.lane.b32.xlu0 %v225, 127
        %v230 = vpop.permute.xlu0 %229
        %231 = vrot.lane.b32.xlu0 %v226, 127
        %v232 = vpop.permute.xlu0 %231
        %vm233 = vcmask 1039360
        %v234 = vsel %vm233, %v230, %v232
        %v236 = vadd.f32 %v224, %v234
        %v237 = vmul.f32 %v208, %v222
        %v238 = vmul.f32 %v208, %v223
        %241 = vrot.lane.b32.xlu0 %v237, 126
        %v242 = vpop.permute.xlu0 %241
        %243 = vrot.lane.b32.xlu0 %v238, 126
        %v244 = vpop.permute.xlu0 %243
        %vm245 = vcmask 1031168
        %v246 = vsel %vm245, %v242, %v244
        %v248 = vadd.f32 %v236, %v246
        %v249 = vmul.f32 %v212, %v222
        %v250 = vmul.f32 %v212, %v223
        %253 = vrot.lane.b32.xlu0 %v249, 125
        %v254 = vpop.permute.xlu0 %253
        %255 = vrot.lane.b32.xlu0 %v250, 125
        %v256 = vpop.permute.xlu0 %255
        %vm257 = vcmask 1022976
        %v258 = vsel %vm257, %v254, %v256
        %v260 = vadd.f32 %v248, %v258
        %v261 = vmul.f32 %v216, %v222
        %v262 = vmul.f32 %v216, %v223
        %265 = vrot.lane.b32.xlu0 %v261, 124
        %v266 = vpop.permute.xlu0 %265
        %267 = vrot.lane.b32.xlu0 %v262, 124
        %v268 = vpop.permute.xlu0 %267
        %vm269 = vcmask 1014784
        %v270 = vsel %vm269, %v266, %v268
        %v272 = vadd.f32 %v260, %v270
        %274 = vset.pattern.permute.xlu0 0
        %275 = vperm.xlu0 %274, %v220
        %v276 = vpop.permute.xlu0 %275
        %279 = vset.pattern.permute.xlu0 0
        %280 = vperm.xlu0 %279, %v221
        %v281 = vpop.permute.xlu0 %280
        %vm283 = vcmask 64512
        %v285 = vsel %vm283, %v218, 0
        %v288 = vsel %vm283, %v219, 0
        %290 = vmatpush.msra.mxu0 0.0
        %291 = vmatpush.msra.mxu0 0.0
        %292 = vmatpush.msra.mxu0 0.0
        %293 = vmatpush.msra.mxu0 0.0
        %294 = vmatpush.msra.mxu0 0.0
        %295 = vmatpush.msra.mxu0 0.0
        %296 = vmatpush.msra.mxu0 0.0
        %297 = vmatpush.msra.mxu0 0.0
        %298 = vmatpush.msra.mxu0 0.0
        %299 = vmatpush.msra.mxu0 0.0
        %300 = vmatpush.msra.mxu0 0.0
        %301 = vmatpush.msra.mxu0 0.0
        %302 = vmatpush.msra.mxu0 0.0
        %303 = vmatpush.msra.mxu0 0.0
        %304 = vmatpush.msra.mxu0 0.0
        %305 = vmatpush.msra.mxu0 %v272
        %306 = vmatmul.f32.gmra.mxu0 %v285
        %v307 = vpop.f32.mrf.mxu0
        %v308 = vadd.f32 %v276, %v307
        %309 = vmatmul.f32.gmra.mxu0 %v288
        %v310 = vpop.f32.mrf.mxu0
        %v311 = vadd.f32 %v281, %v310
        %312 = vdwg.mxu0
        %313 = vst [vmem:[%s190] sm:$0xff] %v308
        %314 = vst [vmem:[%s190 + $0x8] sm:$0xff] %v311
        %s315 = sand.u32 %s115, 1
        %s316 = scalar_lea.sflag [#allocation3], %s315
        %s317 = sand.u32 %s115, 1
        %s318 = smul.addr %s317, 16
        %s319 = scalar_lea.vmem [#allocation2], %s318
        // Predicated region
        $region37: #{tpu_custom_call.1} parent=35 // pred_check
          %p320 = pneg %p125
        $region38: #{tpu_custom_call.1} parent=35 // pred_check_branch
          %322 = sbr.rel (%p320) target = $region40
        $region39: #{tpu_custom_call.1} parent=35 // pred_region
          %324 = vsyncadd %s316, 0
          %s325 = smul.addr %s18, 2
          %s326 = smul.addr %s325, 8
          %s327 = scalar_lea.hbm %s4, %s326
          %s328 = sshll.u32 %s319, 4
          %s329 = int_to_ptr.vmem [resolvable:$true] %s328
          %s330 = sshll.u32 %s327, 4
          %s331 = int_to_ptr.hbm [resolvable:$true] %s330
          %336 = dma.vmem_to_hbm [thread:$0]  %s329, 256, %s331, %s316, 128, 128, 8
        $region40: #{tpu_custom_call.1} parent=35 // pred_fallthru
          _
      $region36: #{tpu_custom_call.1} parent=5 // pred_fallthru
        _
      %p337 = scmp.le.s32.totalorder 2, %s13
      // Predicated region
      $region41: #{tpu_custom_call.1} parent=5 // pred_check
        %p338 = pneg %p337
      $region42: #{tpu_custom_call.1} parent=5 // pred_check_branch
        %340 = sbr.rel (%p338) target = $region44
      $region43: #{tpu_custom_call.1} parent=5 // pred_region
        %s341 = ssub.s32 %s13, 2
        // Predicated region
        $region45: #{tpu_custom_call.1} parent=43 // pred_check
          %p342 = pneg %p131
        $region46: #{tpu_custom_call.1} parent=43 // pred_check_branch
          %344 = sbr.rel (%p342) target = $region48
        $region47: #{tpu_custom_call.1} parent=43 // pred_region
          %s345 = sand.u32 %s116, 1
          %s346 = scalar_lea.sflag [#allocation3], %s345
          %s347 = sand.u32 %s116, 1
          %s348 = smul.addr %s347, 16
          %s349 = scalar_lea.vmem [#allocation2], %s348
          %351 = dma.done %s346, 256
        $region48: #{tpu_custom_call.1} parent=43 // pred_fallthru
          _
      $region44: #{tpu_custom_call.1} parent=5 // pred_fallthru
        _
    $region6: #{tpu_custom_call.1} parent=1 // loop_footer
      %s17 = sadd.s32 1, %s13
    $region7: #{tpu_custom_call.1} parent=1 // loop_footer_branch
      %12 = sbr.rel target = $region3
    $region8: #{tpu_custom_call.1} parent=1 // loop_exit
      _
    %352 = vsyncpa [#allocation3], 1
    %s353 = scalar_lea.sflag [#allocation3], 1
    %354 = vsyncpa %s353, 1

</llo_original>
